<compile_context>
chip_gen: v5e
topology: v5e:2x2
jax: 0.10.0
libtpu: 0.0.40
codegen_flags: <defaults>
</compile_context>

<pallas_src>
import functools

import jax
import jax.numpy as jnp
from jax.experimental import pallas as pl
from jax.experimental.pallas import tpu as pltpu

TEMPERATURE = 1.0


def _round_up(x, m):
    return ((x + m - 1) // m) * m


def _cdiv(a, b):
    return -(-a // b)


def _vmem_budget_bytes():
    """~75% of physical VMEM (96 MiB on v5e/v6e, 48 MiB on v7x); safe fallback."""
    cap = 64 * 1024 * 1024
    try:
        info = pltpu.get_tpu_info()
        cap = int(getattr(info, "vmem_capacity_bytes", cap))
    except Exception:
        pass
    return (cap * 3) // 4


def _plan_tiles(B, N, D, block_b, block_n, vmem_budget):
    """Pick (tb, tn): large tb for image-HBM reuse, >= 2 B tiles for megacore,
    then shrink tn (and only then tb) until the estimated footprint fits."""
    B8 = _round_up(max(B, 1), 8)
    N128 = _round_up(max(N, 1), 128)

    tn = min(_round_up(max(block_n, 128), 128), N128)

    nb = 1 if B8 <= 8 else max(2, _cdiv(B8, max(block_b, 8)))
    tb = _round_up(_cdiv(B8, nb), 8)

    def footprint(tb_, tn_):
        # f32 operand tiles, double-buffered by the BlockSpec pipeline, plus
        # ~8 f32 (tb, tn) element-wise temporaries (logits / exp / selects).
        return 4 * (2 * (tb_ * D + tn_ * D) + 8 * tb_ * tn_)

    while footprint(tb, tn) > vmem_budget and tn > 128:
        tn -= 128
    while footprint(tb, tn) > vmem_budget and tb > 8:
        nb += 1
        tb = _round_up(_cdiv(B8, nb), 8)
    return tb, tn


def _supcon_kernel(text_ref, image_ref, tlab_ref, itgt_ref, mlp_ref,
                   m_sc, l_sc, sml_sc, smask_sc, *, n_valid, tile_n, mask_cols):
    """One (B-tile, N-tile) grid step of the supervised-contrastive loss."""
    k = pl.program_id(1)
    nk = pl.num_programs(1)

    # ---- init per-anchor accumulators at the start of the N reduction ----
    @pl.when(k == 0)
    def _():
        m_sc[...] = jnp.full_like(m_sc, -jnp.inf)
        l_sc[...] = jnp.zeros_like(l_sc)
        sml_sc[...] = jnp.zeros_like(sml_sc)
        smask_sc[...] = jnp.zeros_like(smask_sc)

    # ---- logits tile: (tb, tn) = text @ image^T, contraction over D ----
    # bf16 operands (cast on the VPU here -- no extra HBM round-trip), f32 MXU
    # accumulation, contraction over the trailing axis of both -> no transpose.
    logits = jax.lax.dot_general(
        text_ref[...].astype(jnp.bfloat16),
        image_ref[...].astype(jnp.bfloat16),
        dimension_numbers=(((1,), (1,)), ((), ())),
        preferred_element_type=jnp.float32,
    )
    if TEMPERATURE != 1.0:                       # static: nothing emitted for T == 1
        logits = logits * (1.0 / TEMPERATURE)

    # ---- positive mask (boolean only; fused into selects below) ----
    cmp = tlab_ref[...] == itgt_ref[...]         # (tb, tn) via broadcast
    if mask_cols:                                # static: only when N was padded
        col = k * tile_n + jax.lax.broadcasted_iota(jnp.int32, logits.shape, 1)
        valid = col < n_valid
        cmp = jnp.logical_and(cmp, valid)
        logits = jnp.where(valid, logits, -jnp.inf)

    # ---- online log-sum-exp (exactly one exp per logit) ----
    m_old = m_sc[...]
    m_new = jnp.maximum(m_old, jnp.max(logits, axis=1, keepdims=True))
    l_sc[...] = (l_sc[...] * jnp.exp(m_old - m_new)
                 + jnp.sum(jnp.exp(logits - m_new), axis=1, keepdims=True))
    m_sc[...] = m_new

    # ---- positive-logit accumulators: selects, no f32 mask materialisation ----
    sml_sc[...] += jnp.sum(jnp.where(cmp, logits, 0.0), axis=1, keepdims=True)
    smask_sc[...] += jnp.sum(jnp.where(cmp, 1.0, 0.0), axis=1, keepdims=True)

    # ---- finalize once, at the last N tile ----
    @pl.when(k == nk - 1)
    def _():
        lse = m_sc[...] + jnp.log(l_sc[...])     # log sum_j exp(logit_ij)
        # mean over positives of log_prob = (sum(mask*logits) - sum(mask)*lse)/sum(mask)
        # NOTE: unguarded division, matching the PyTorch module (NaN when an
        # anchor has zero positives).
        mlp_ref[...] = (sml_sc[...] - smask_sc[...] * lse) / smask_sc[...]


@functools.partial(jax.jit, static_argnames=("block_b", "block_n"))
def supcon_loss(text_features, image_features, t_label, i_targets,
                *, block_b=1024, block_n=512):
    B, D = text_features.shape
    N, _ = image_features.shape

    vmem_budget = _vmem_budget_bytes()
    tb, tn = _plan_tiles(B, N, D, block_b, block_n, vmem_budget)
    B_pad = _round_up(B, tb)
    N_pad = _round_up(N, tn)
    grid = (B_pad // tb, N_pad // tn)

    # Text is read from HBM exactly once (resident across the N reduction):
    # stream it as f32 and cast in-kernel.  The image matrix is re-streamed
    # once per B tile; only pre-cast it to bf16 when that reuse factor is >= 3
    # (otherwise the extra cast pass costs more HBM traffic than it saves).
    tf = text_features.astype(jnp.float32)
    imf = image_features.astype(jnp.bfloat16 if grid[0] >= 3 else jnp.float32)
    if B_pad != B:
        tf = jnp.pad(tf, ((0, B_pad - B), (0, 0)))
    if N_pad != N:
        imf = jnp.pad(imf, ((0, N_pad - N), (0, 0)))

    tlab = t_label.astype(jnp.int32)
    itgt = i_targets.astype(jnp.int32)
    if B_pad != B:
        tlab = jnp.pad(tlab, (0, B_pad - B), constant_values=-1)
    if N_pad != N:
        itgt = jnp.pad(itgt, (0, N_pad - N), constant_values=-2)
    tlab = tlab.reshape(B_pad, 1)
    itgt = itgt.reshape(1, N_pad)

    kernel = functools.partial(_supcon_kernel, n_valid=N, tile_n=tn,
                               mask_cols=(N_pad != N))

    mean_log_prob_pos = pl.pallas_call(
        kernel,
        out_shape=jax.ShapeDtypeStruct((B_pad, 1), jnp.float32),
        grid=grid,
        in_specs=[
            pl.BlockSpec((tb, D), lambda b, k: (b, 0)),   # text (resident over k)
            pl.BlockSpec((tn, D), lambda b, k: (k, 0)),   # image (streamed over k)
            pl.BlockSpec((tb, 1), lambda b, k: (b, 0)),   # t_label column
            pl.BlockSpec((1, tn), lambda b, k: (0, k)),   # i_targets row
        ],
        out_specs=pl.BlockSpec((tb, 1), lambda b, k: (b, 0)),
        scratch_shapes=[pltpu.VMEM((tb, 1), jnp.float32)] * 4,  # m, l, sum(m*lg), sum(m)
        compiler_params=pltpu.CompilerParams(
            dimension_semantics=("parallel", "arbitrary"),
            vmem_limit_bytes=int(vmem_budget),
        ),
    )(tf, imf, tlab, itgt)

    # Drop padded anchor rows; tiny final reduction over B scalars in plain JAX.
    return -jnp.mean(mean_log_prob_pos[:B, 0])


def _reference(text_features, image_features, t_label, i_targets):
    """Plain-JAX mirror of the PyTorch module (f32 end to end)."""
    mask = (t_label[:, None] == i_targets[None, :]).astype(jnp.float32)
    logits = (text_features @ image_features.T) / TEMPERATURE
    logits = logits - jnp.max(logits, axis=1, keepdims=True)
    log_prob = logits - jnp.log(jnp.sum(jnp.exp(logits), axis=1, keepdims=True))
    mean_log_prob_pos = jnp.sum(mask * log_prob, axis=1) / jnp.sum(mask, axis=1)
    return -jnp.mean(mean_log_prob_pos)


if __name__ == "__main__":
    key = jax.random.PRNGKey(0)
    k1, k2, k3, k4 = jax.random.split(key, 4)

    # Small, deliberately non-tile-aligned shapes to exercise B/N padding and
    # the multi-tile grid (B=20 pads to 24/32, N=200 pads to 256).
    B, N, D, NUM_CLASSES = 20, 200, 64, 4
    text_features = jax.random.normal(k1, (B, D), dtype=jnp.float32)
    image_features = jax.random.normal(k2, (N, D), dtype=jnp.float32)
    # Every anchor label appears among the image targets -> no zero-positive rows.
    t_label = jax.random.randint(k3, (B,), 0, NUM_CLASSES, dtype=jnp.int32)
    i_targets = jnp.concatenate(
        [t_label,
         jax.random.randint(k4, (N - B,), 0, NUM_CLASSES, dtype=jnp.int32)]
    )

    # Explicit small tiles: 3x2 grid (tb=8, tn=128) -> exercises the online
    # reduction over multiple k tiles plus the padded-column masking.
    loss_small = jax.block_until_ready(
        supcon_loss(text_features, image_features, t_label, i_targets,
                    block_b=8, block_n=128)
    )
    # Default (production) tile targets -> exercises the auto tile planner
    # (2 B tiles, single N tile with masked padding at these shapes).
    loss_default = jax.block_until_ready(
        supcon_loss(text_features, image_features, t_label, i_targets)
    )

    # Reference with the same bf16 operand rounding as the in-kernel cast.
    ref_bf16 = _reference(text_features.astype(jnp.bfloat16).astype(jnp.float32),
                          image_features.astype(jnp.bfloat16).astype(jnp.float32),
                          t_label, i_targets)
    # Full f32 reference (loose: bf16 matmul-operand rounding).
    ref_f32 = _reference(text_features, image_features, t_label, i_targets)

    for loss in (loss_small, loss_default):
        assert jnp.isfinite(loss), loss
        assert jnp.allclose(loss, ref_bf16, atol=5e-3, rtol=1e-3), (loss, ref_bf16)
        assert jnp.allclose(loss, ref_f32, atol=5e-2, rtol=5e-2), (loss, ref_f32)
    print("KERNEL_OK")
</pallas_src>

<mosaic_0001>
module attributes {stable_mosaic.version = 11 : i64} {
  func.func @_supcon_kernel(%arg0: i32, %arg1: i32, %arg2: memref<8x64xf32, #tpu.memory_space<vmem>>, %arg3: memref<128x64xbf16, #tpu.memory_space<vmem>>, %arg4: memref<8x1xi32, #tpu.memory_space<vmem>>, %arg5: memref<1x128xi32, #tpu.memory_space<vmem>>, %arg6: memref<8x1xf32, #tpu.memory_space<vmem>>, %arg7: memref<8x1xf32, #tpu.memory_space<vmem>>, %arg8: memref<8x1xf32, #tpu.memory_space<vmem>>, %arg9: memref<8x1xf32, #tpu.memory_space<vmem>>, %arg10: memref<8x1xf32, #tpu.memory_space<vmem>>) attributes {dimension_semantics = [#tpu.dimension_semantics<parallel>, #tpu.dimension_semantics<arbitrary>], iteration_bounds = array<i64: 3, 2>, scalar_prefetch = 0 : i64, scratch_operands = 4 : i64, tpu.core_type = #tpu.core_type<tc>, window_params = [{transform_indices = @transform_0, window_bounds = array<i64: 8, 64>}, {transform_indices = @transform_1, window_bounds = array<i64: 128, 64>}, {transform_indices = @transform_2, window_bounds = array<i64: 8, 1>}, {transform_indices = @transform_3, window_bounds = array<i64: 1, 128>}, {transform_indices = @transform_4, window_bounds = array<i64: 8, 1>}]} {
    %c0_i32 = arith.constant 0 : i32
    %0 = arith.cmpi eq, %arg1, %c0_i32 : i32
    %1 = arith.extui %0 : i1 to i32
    %c0_i32_0 = arith.constant 0 : i32
    %2 = arith.cmpi ne, %1, %c0_i32_0 : i32
    scf.if %2 {
      %cst_33 = arith.constant 0xFF800000 : f32
      %55 = vector.broadcast %cst_33 : f32 to vector<8x1xf32>
      %c0_34 = arith.constant 0 : index
      %c0_35 = arith.constant 0 : index
      %56 = vector.load %arg7[%c0_34, %c0_35] : memref<8x1xf32, #tpu.memory_space<vmem>>, vector<8x1xf32>
      tpu.vector_store %arg7[%c0_34, %c0_35], %55 {strides = array<i32>} : memref<8x1xf32, #tpu.memory_space<vmem>>, vector<8x1xf32>,
      %cst_36 = arith.constant 0.000000e+00 : f32
      %57 = vector.broadcast %cst_36 : f32 to vector<8x1xf32>
      %c0_37 = arith.constant 0 : index
      %c0_38 = arith.constant 0 : index
      %58 = vector.load %arg8[%c0_37, %c0_38] : memref<8x1xf32, #tpu.memory_space<vmem>>, vector<8x1xf32>
      tpu.vector_store %arg8[%c0_37, %c0_38], %57 {strides = array<i32>} : memref<8x1xf32, #tpu.memory_space<vmem>>, vector<8x1xf32>,
      %cst_39 = arith.constant 0.000000e+00 : f32
      %59 = vector.broadcast %cst_39 : f32 to vector<8x1xf32>
      %c0_40 = arith.constant 0 : index
      %c0_41 = arith.constant 0 : index
      %60 = vector.load %arg9[%c0_40, %c0_41] : memref<8x1xf32, #tpu.memory_space<vmem>>, vector<8x1xf32>
      tpu.vector_store %arg9[%c0_40, %c0_41], %59 {strides = array<i32>} : memref<8x1xf32, #tpu.memory_space<vmem>>, vector<8x1xf32>,
      %cst_42 = arith.constant 0.000000e+00 : f32
      %61 = vector.broadcast %cst_42 : f32 to vector<8x1xf32>
      %c0_43 = arith.constant 0 : index
      %c0_44 = arith.constant 0 : index
      %62 = vector.load %arg10[%c0_43, %c0_44] : memref<8x1xf32, #tpu.memory_space<vmem>>, vector<8x1xf32>
      tpu.vector_store %arg10[%c0_43, %c0_44], %61 {strides = array<i32>} : memref<8x1xf32, #tpu.memory_space<vmem>>, vector<8x1xf32>,
    } else {
    }
    %c0 = arith.constant 0 : index
    %c0_1 = arith.constant 0 : index
    %3 = vector.load %arg2[%c0, %c0_1] : memref<8x64xf32, #tpu.memory_space<vmem>>, vector<8x64xf32>
    %4 = arith.truncf %3 : vector<8x64xf32> to vector<8x64xbf16>
    %c0_2 = arith.constant 0 : index
    %c0_3 = arith.constant 0 : index
    %5 = vector.load %arg3[%c0_2, %c0_3] : memref<128x64xbf16, #tpu.memory_space<vmem>>, vector<128x64xbf16>
    %cst = arith.constant dense<0.000000e+00> : vector<8x128xf32>
    %6 = tpu.matmul %4, %5, %cst {dimension_numbers = #tpu.dot_dimension_numbers<[1], [1], [0], [0], [0, 0, 1, 0], [], []>} : vector<8x64xbf16>, vector<128x64xbf16>, vector<8x128xf32> -> vector<8x128xf32>
    %c0_4 = arith.constant 0 : index
    %c0_5 = arith.constant 0 : index
    %7 = vector.load %arg4[%c0_4, %c0_5] : memref<8x1xi32, #tpu.memory_space<vmem>>, vector<8x1xi32>
    %c0_6 = arith.constant 0 : index
    %c0_7 = arith.constant 0 : index
    %8 = vector.load %arg5[%c0_6, %c0_7] : memref<1x128xi32, #tpu.memory_space<vmem>>, vector<1x128xi32>
    %9 = vector.broadcast %7 : vector<8x1xi32> to vector<8x128xi32>
    %10 = vector.broadcast %8 : vector<1x128xi32> to vector<8x128xi32>
    %11 = arith.cmpi eq, %9, %10 : vector<8x128xi32>
    %c128_i32 = arith.constant 128 : i32
    %12 = arith.muli %arg1, %c128_i32 : i32
    %13 = tpu.iota {dimensions = array<i32: 1>} : vector<8x128xi32>
    %14 = vector.broadcast %12 : i32 to vector<8x128xi32>
    %15 = arith.addi %14, %13 : vector<8x128xi32>
    %c200_i32 = arith.constant 200 : i32
    %16 = vector.broadcast %c200_i32 : i32 to vector<8x128xi32>
    %17 = arith.cmpi slt, %15, %16 : vector<8x128xi32>
    %18 = arith.andi %11, %17 : vector<8x128xi1>
    %cst_8 = arith.constant 0xFF800000 : f32
    %19 = vector.broadcast %cst_8 : f32 to vector<8x128xf32>
    %20 = arith.select %17, %6, %19 : vector<8x128xi1>, vector<8x128xf32>
    %c0_9 = arith.constant 0 : index
    %c0_10 = arith.constant 0 : index
    %21 = vector.load %arg7[%c0_9, %c0_10] : memref<8x1xf32, #tpu.memory_space<vmem>>, vector<8x1xf32>
    %cst_11 = arith.constant dense<0xFF800000> : vector<8xf32>
    %22 = vector.multi_reduction <maximumf>, %20, %cst_11 [1] : vector<8x128xf32> to vector<8xf32>
    %23 = vector.shape_cast %22 : vector<8xf32> to vector<8x1xf32>
    %24 = arith.maximumf %21, %23 : vector<8x1xf32>
    %c0_12 = arith.constant 0 : index
    %c0_13 = arith.constant 0 : index
    %25 = vector.load %arg8[%c0_12, %c0_13] : memref<8x1xf32, #tpu.memory_space<vmem>>, vector<8x1xf32>
    %26 = arith.subf %21, %24 : vector<8x1xf32>
    %27 = math.exp %26 : vector<8x1xf32>
    %28 = arith.mulf %25, %27 : vector<8x1xf32>
    %29 = vector.broadcast %24 : vector<8x1xf32> to vector<8x128xf32>
    %30 = arith.subf %20, %29 : vector<8x128xf32>
    %31 = math.exp %30 : vector<8x128xf32>
    %cst_14 = arith.constant dense<0.000000e+00> : vector<8xf32>
    %32 = vector.multi_reduction <add>, %31, %cst_14 [1] : vector<8x128xf32> to vector<8xf32>
    %33 = vector.shape_cast %32 : vector<8xf32> to vector<8x1xf32>
    %34 = arith.addf %28, %33 : vector<8x1xf32>
    %c0_15 = arith.constant 0 : index
    %c0_16 = arith.constant 0 : index
    %35 = vector.load %arg8[%c0_15, %c0_16] : memref<8x1xf32, #tpu.memory_space<vmem>>, vector<8x1xf32>
    tpu.vector_store %arg8[%c0_15, %c0_16], %34 {strides = array<i32>} : memref<8x1xf32, #tpu.memory_space<vmem>>, vector<8x1xf32>,
    %c0_17 = arith.constant 0 : index
    %c0_18 = arith.constant 0 : index
    %36 = vector.load %arg7[%c0_17, %c0_18] : memref<8x1xf32, #tpu.memory_space<vmem>>, vector<8x1xf32>
    tpu.vector_store %arg7[%c0_17, %c0_18], %24 {strides = array<i32>} : memref<8x1xf32, #tpu.memory_space<vmem>>, vector<8x1xf32>,
    %c0_19 = arith.constant 0 : index
    %c0_20 = arith.constant 0 : index
    %37 = vector.load %arg9[%c0_19, %c0_20] : memref<8x1xf32, #tpu.memory_space<vmem>>, vector<8x1xf32>
    %cst_21 = arith.constant 0.000000e+00 : f32
    %38 = vector.broadcast %cst_21 : f32 to vector<8x128xf32>
    %39 = arith.select %18, %20, %38 : vector<8x128xi1>, vector<8x128xf32>
    %cst_22 = arith.constant dense<0.000000e+00> : vector<8xf32>
    %40 = vector.multi_reduction <add>, %39, %cst_22 [1] : vector<8x128xf32> to vector<8xf32>
    %41 = vector.shape_cast %40 : vector<8xf32> to vector<8x1xf32>
    %42 = arith.addf %37, %41 : vector<8x1xf32>
    %c0_23 = arith.constant 0 : index
    %c0_24 = arith.constant 0 : index
    %43 = vector.load %arg9[%c0_23, %c0_24] : memref<8x1xf32, #tpu.memory_space<vmem>>, vector<8x1xf32>
    tpu.vector_store %arg9[%c0_23, %c0_24], %42 {strides = array<i32>} : memref<8x1xf32, #tpu.memory_space<vmem>>, vector<8x1xf32>,
    %c0_25 = arith.constant 0 : index
    %c0_26 = arith.constant 0 : index
    %44 = vector.load %arg10[%c0_25, %c0_26] : memref<8x1xf32, #tpu.memory_space<vmem>>, vector<8x1xf32>
    %cst_27 = arith.constant 1.000000e+00 : f32
    %cst_28 = arith.constant 0.000000e+00 : f32
    %45 = vector.broadcast %cst_27 : f32 to vector<8x128xf32>
    %46 = vector.broadcast %cst_28 : f32 to vector<8x128xf32>
    %47 = arith.select %18, %45, %46 : vector<8x128xi1>, vector<8x128xf32>
    %cst_29 = arith.constant dense<0.000000e+00> : vector<8xf32>
    %48 = vector.multi_reduction <add>, %47, %cst_29 [1] : vector<8x128xf32> to vector<8xf32>
    %49 = vector.shape_cast %48 : vector<8xf32> to vector<8x1xf32>
    %50 = arith.addf %44, %49 : vector<8x1xf32>
    %c0_30 = arith.constant 0 : index
    %c0_31 = arith.constant 0 : index
    %51 = vector.load %arg10[%c0_30, %c0_31] : memref<8x1xf32, #tpu.memory_space<vmem>>, vector<8x1xf32>
    tpu.vector_store %arg10[%c0_30, %c0_31], %50 {strides = array<i32>} : memref<8x1xf32, #tpu.memory_space<vmem>>, vector<8x1xf32>,
    %c1_i32 = arith.constant 1 : i32
    %52 = arith.cmpi eq, %arg1, %c1_i32 : i32
    %53 = arith.extui %52 : i1 to i32
    %c0_i32_32 = arith.constant 0 : i32
    %54 = arith.cmpi ne, %53, %c0_i32_32 : i32
    scf.if %54 {
      %c0_33 = arith.constant 0 : index
      %c0_34 = arith.constant 0 : index
      %55 = vector.load %arg7[%c0_33, %c0_34] : memref<8x1xf32, #tpu.memory_space<vmem>>, vector<8x1xf32>
      %c0_35 = arith.constant 0 : index
      %c0_36 = arith.constant 0 : index
      %56 = vector.load %arg8[%c0_35, %c0_36] : memref<8x1xf32, #tpu.memory_space<vmem>>, vector<8x1xf32>
      %57 = math.log %56 : vector<8x1xf32>
      %58 = arith.addf %55, %57 : vector<8x1xf32>
      %c0_37 = arith.constant 0 : index
      %c0_38 = arith.constant 0 : index
      %59 = vector.load %arg9[%c0_37, %c0_38] : memref<8x1xf32, #tpu.memory_space<vmem>>, vector<8x1xf32>
      %c0_39 = arith.constant 0 : index
      %c0_40 = arith.constant 0 : index
      %60 = vector.load %arg10[%c0_39, %c0_40] : memref<8x1xf32, #tpu.memory_space<vmem>>, vector<8x1xf32>
      %61 = arith.mulf %60, %58 : vector<8x1xf32>
      %62 = arith.subf %59, %61 : vector<8x1xf32>
      %c0_41 = arith.constant 0 : index
      %c0_42 = arith.constant 0 : index
      %63 = vector.load %arg10[%c0_41, %c0_42] : memref<8x1xf32, #tpu.memory_space<vmem>>, vector<8x1xf32>
      %64 = arith.divf %62, %63 : vector<8x1xf32>
      %c0_43 = arith.constant 0 : index
      %c0_44 = arith.constant 0 : index
      %65 = vector.load %arg6[%c0_43, %c0_44] : memref<8x1xf32, #tpu.memory_space<vmem>>, vector<8x1xf32>
      tpu.vector_store %arg6[%c0_43, %c0_44], %64 {strides = array<i32>} : memref<8x1xf32, #tpu.memory_space<vmem>>, vector<8x1xf32>,
    } else {
    }
    return
  }
  func.func @transform_0(%arg0: i32, %arg1: i32) -> (i32, i32) {
    %c0_i32 = arith.constant 0 : i32
    %c0_i32_0 = arith.constant 0 : i32
    return %arg0, %c0_i32 : i32, i32
  }
  func.func @transform_1(%arg0: i32, %arg1: i32) -> (i32, i32) {
    %c0_i32 = arith.constant 0 : i32
    %c0_i32_0 = arith.constant 0 : i32
    return %arg1, %c0_i32 : i32, i32
  }
  func.func @transform_2(%arg0: i32, %arg1: i32) -> (i32, i32) {
    %c0_i32 = arith.constant 0 : i32
    %c0_i32_0 = arith.constant 0 : i32
    return %arg0, %c0_i32 : i32, i32
  }
  func.func @transform_3(%arg0: i32, %arg1: i32) -> (i32, i32) {
    %c0_i32 = arith.constant 0 : i32
    %c0_i32_0 = arith.constant 0 : i32
    return %c0_i32, %arg1 : i32, i32
  }
  func.func @transform_4(%arg0: i32, %arg1: i32) -> (i32, i32) {
    %c0_i32 = arith.constant 0 : i32
    %c0_i32_0 = arith.constant 0 : i32
    return %arg0, %c0_i32 : i32, i32
  }
}

</mosaic_0001>

<llo_original>
// kernel: supcon_loss.1
$region0: #{supcon_loss.1}
  #allocation0 [shape = 'u32[]', space=smem, size = 0x4, offset = 0x4, fixed_abs, tag = 'smem constant byte address 0x4 - core index']
  #allocation1 [shape = 'u32[72,128]{1,0:T(1,128)}', space=vmem, size = 0x9000, scoped, tag = 'internal scratch']
  #allocation2 [shape = 'f32[8,1]{1,0:T(8,128)}', space=vmem, size = 0x1000, scoped, tag = 'scratch operand']
  #allocation3 [shape = 'f32[8,1]{1,0:T(8,128)}', space=vmem, size = 0x1000, scoped, tag = 'scratch operand']
  #allocation4 [shape = 'f32[8,1]{1,0:T(8,128)}', space=vmem, size = 0x1000, scoped, tag = 'scratch operand']
  #allocation5 [shape = 'f32[8,1]{1,0:T(8,128)}', space=vmem, size = 0x1000, scoped, tag = 'scratch operand']
  %s0 = inlined_call_operand.vmem [shape: f32[24,64], index: 0, kind: input, shape index: {}]
  %s1 = inlined_call_operand.vmem [shape: bf16[256,64], index: 1, kind: input, shape index: {}]
  %s2 = inlined_call_operand.vmem [shape: s32[24,1], index: 2, kind: input, shape index: {}]
  %s3 = inlined_call_operand.vmem [shape: s32[1,256], index: 3, kind: input, shape index: {}]
  %s4 = inlined_call_operand.vmem [shape: f32[24,1], index: 4, kind: output, shape index: {}]
  %s5 = sld [smem:[#allocation0]]
  $region57: #{supcon_loss.1} parent=0
    _
  %s7 = ssub.s32 1, %s5
  %s8 = scalar_select 0, %s7, %s5
  loop: start=0, step=1, limit=8
  $region2: #{supcon_loss.1} parent=0 // loop_pre_header
    _
  $region3: #{supcon_loss.1} parent=0 // loop_header
    %s10 = sphi 0, %s14
    %p11 = scmp.ge.s32.totalorder %s10, 8
    %s17 = sphi 0, %s29
    %s18 = sphi 0, %s25
    %s19 = sphi 0, %s17
    %s20 = sphi 0, %s18
    %s21 = sphi 0, %s19
    %s22 = sphi 0, %s20
    %s32 = sphi 0, %s34
    %s35 = sphi 0, %s32
    %s36 = sphi 0, %s35
    %s52 = sphi 0, %s36
    %s58 = sphi 0, %s60
    %s61 = sphi 0, %s58
    %s62 = sphi 0, %s61
    %s78 = sphi 0, %s62
    %s84 = sphi 0, %s86
    %s87 = sphi 0, %s84
    %s88 = sphi 0, %s87
    %s104 = sphi 0, %s88
    %s110 = sphi 0, %s112
    %s113 = sphi 0, %s110
    %s114 = sphi 0, %s113
    %s130 = sphi 0, %s114
    %s136 = sphi 0, %s138
    %s139 = sphi 0, %s136
    %s140 = sphi 0, %s139
    %s156 = sphi 0, %s140
  $region4: #{supcon_loss.1} parent=0 // loop_header_branch
    %13 = sbr.rel (%p11) target = $region8
  $region5: #{supcon_loss.1} parent=0 // loop_body
    %s15 = ssub.s32 %s10, 1
    %s16 = ssub.s32 %s10, 2
    %s23 = sadd.s32 1, %s18
    %p24 = scmp.ge.s32.totalorder %s23, 2
    %s25 = scalar_select %p24, 0, %s23
    %s26 = sadd.s32 1, %s17
    %s27 = scalar_select %p24, %s26, %s17
    %p28 = scmp.ge.s32.totalorder %s27, 3
    %s29 = scalar_select %p28, 0, %s27
    %s30 = ssub.s32 %s17, %s29
    %p31 = scmp.eq.s32.totalorder %s30, 0
    %s33 = sadd.s32 %s32, 1
    %s34 = scalar_select %p31, %s32, %s33
    %p37 = pneg %p31
    %p38 = scmp.eq.s32.totalorder %s10, 5
    %p39 = por %p37, %p38
    %p40 = scmp.ne.s32.totalorder %s32, %s35
    %p41 = scmp.eq.s32.totalorder %s10, 0
    %p42 = por %p40, %p41
    %p43 = scmp.ne.s32.totalorder %s32, %s35
    %p44 = scmp.eq.s32.totalorder %s15, 5
    %p45 = por %p43, %p44
    %p46 = scmp.ne.s32.totalorder %s35, %s36
    %p47 = scmp.eq.s32.totalorder %s15, 0
    %p48 = por %p46, %p47
    %p49 = scmp.ne.s32.totalorder %s35, %s36
    %p50 = scmp.eq.s32.totalorder %s16, 5
    %p51 = por %p49, %p50
    %p53 = scmp.ne.s32.totalorder %s36, %s52
    %p54 = scmp.eq.s32.totalorder %s16, 0
    %p55 = por %p53, %p54
    %s56 = ssub.s32 %s18, %s25
    %p57 = scmp.eq.s32.totalorder %s56, 0
    %s59 = sadd.s32 %s58, 1
    %s60 = scalar_select %p57, %s58, %s59
    %p63 = pneg %p57
    %p64 = scmp.eq.s32.totalorder %s10, 5
    %p65 = por %p63, %p64
    %p66 = scmp.ne.s32.totalorder %s58, %s61
    %p67 = scmp.eq.s32.totalorder %s10, 0
    %p68 = por %p66, %p67
    %p69 = scmp.ne.s32.totalorder %s58, %s61
    %p70 = scmp.eq.s32.totalorder %s15, 5
    %p71 = por %p69, %p70
    %p72 = scmp.ne.s32.totalorder %s61, %s62
    %p73 = scmp.eq.s32.totalorder %s15, 0
    %p74 = por %p72, %p73
    %p75 = scmp.ne.s32.totalorder %s61, %s62
    %p76 = scmp.eq.s32.totalorder %s16, 5
    %p77 = por %p75, %p76
    %p79 = scmp.ne.s32.totalorder %s62, %s78
    %p80 = scmp.eq.s32.totalorder %s16, 0
    %p81 = por %p79, %p80
    %s82 = ssub.s32 %s17, %s29
    %p83 = scmp.eq.s32.totalorder %s82, 0
    %s85 = sadd.s32 %s84, 1
    %s86 = scalar_select %p83, %s84, %s85
    %p89 = pneg %p83
    %p90 = scmp.eq.s32.totalorder %s10, 5
    %p91 = por %p89, %p90
    %p92 = scmp.ne.s32.totalorder %s84, %s87
    %p93 = scmp.eq.s32.totalorder %s10, 0
    %p94 = por %p92, %p93
    %p95 = scmp.ne.s32.totalorder %s84, %s87
    %p96 = scmp.eq.s32.totalorder %s15, 5
    %p97 = por %p95, %p96
    %p98 = scmp.ne.s32.totalorder %s87, %s88
    %p99 = scmp.eq.s32.totalorder %s15, 0
    %p100 = por %p98, %p99
    %p101 = scmp.ne.s32.totalorder %s87, %s88
    %p102 = scmp.eq.s32.totalorder %s16, 5
    %p103 = por %p101, %p102
    %p105 = scmp.ne.s32.totalorder %s88, %s104
    %p106 = scmp.eq.s32.totalorder %s16, 0
    %p107 = por %p105, %p106
    %s108 = ssub.s32 %s18, %s25
    %p109 = scmp.eq.s32.totalorder %s108, 0
    %s111 = sadd.s32 %s110, 1
    %s112 = scalar_select %p109, %s110, %s111
    %p115 = pneg %p109
    %p116 = scmp.eq.s32.totalorder %s10, 5
    %p117 = por %p115, %p116
    %p118 = scmp.ne.s32.totalorder %s110, %s113
    %p119 = scmp.eq.s32.totalorder %s10, 0
    %p120 = por %p118, %p119
    %p121 = scmp.ne.s32.totalorder %s110, %s113
    %p122 = scmp.eq.s32.totalorder %s15, 5
    %p123 = por %p121, %p122
    %p124 = scmp.ne.s32.totalorder %s113, %s114
    %p125 = scmp.eq.s32.totalorder %s15, 0
    %p126 = por %p124, %p125
    %p127 = scmp.ne.s32.totalorder %s113, %s114
    %p128 = scmp.eq.s32.totalorder %s16, 5
    %p129 = por %p127, %p128
    %p131 = scmp.ne.s32.totalorder %s114, %s130
    %p132 = scmp.eq.s32.totalorder %s16, 0
    %p133 = por %p131, %p132
    %s134 = ssub.s32 %s17, %s29
    %p135 = scmp.eq.s32.totalorder %s134, 0
    %s137 = sadd.s32 %s136, 1
    %s138 = scalar_select %p135, %s136, %s137
    %p141 = pneg %p135
    %p142 = scmp.eq.s32.totalorder %s10, 5
    %p143 = por %p141, %p142
    %p144 = scmp.ne.s32.totalorder %s136, %s139
    %p145 = scmp.eq.s32.totalorder %s10, 0
    %p146 = por %p144, %p145
    %p147 = scmp.ne.s32.totalorder %s136, %s139
    %p148 = scmp.eq.s32.totalorder %s15, 5
    %p149 = por %p147, %p148
    %p150 = scmp.ne.s32.totalorder %s139, %s140
    %p151 = scmp.eq.s32.totalorder %s15, 0
    %p152 = por %p150, %p151
    %p153 = scmp.ne.s32.totalorder %s139, %s140
    %p154 = scmp.eq.s32.totalorder %s16, 5
    %p155 = por %p153, %p154
    %p157 = scmp.ne.s32.totalorder %s140, %s156
    %p158 = scmp.eq.s32.totalorder %s16, 0
    %p159 = por %p157, %p158
    %p160 = scmp.le.s32.totalorder 1, %s10
    %p161 = scmp.lt.s32.totalorder %s10, 7
    %p162 = pnand %p160, %p161
    %p163 = pneg %p162
    // Predicated region
    $region9: #{supcon_loss.1} parent=5 // pred_check
      _
    $region10: #{supcon_loss.1} parent=5 // pred_check_branch
      %165 = sbr.rel (%p162) target = $region12
    $region11: #{supcon_loss.1} parent=5 // pred_region
      %s166 = ssub.s32 %s10, 1
    $region12: #{supcon_loss.1} parent=5 // pred_fallthru
      _
    %p167 = scmp.lt.s32.totalorder %s10, 6
    // Predicated region
    $region13: #{supcon_loss.1} parent=5 // pred_check
      %p168 = pneg %p167
    $region14: #{supcon_loss.1} parent=5 // pred_check_branch
      %170 = sbr.rel (%p168) target = $region16
    $region15: #{supcon_loss.1} parent=5 // pred_region
      // Predicated region
      $region17: #{supcon_loss.1} parent=15 // pred_check
        %p171 = pneg %p42
      $region18: #{supcon_loss.1} parent=15 // pred_check_branch
        %173 = sbr.rel (%p171) target = $region20
      $region19: #{supcon_loss.1} parent=15 // pred_region
        %p174 = scmp.lt.s32.totalorder %s17, 2
        %s175 = scalar_select %p174, %s17, 2
        %s176 = smul.addr %s175, 8
        %s177 = scalar_lea.vmem %s0, %s176
      $region20: #{supcon_loss.1} parent=15 // pred_fallthru
        _
      // Predicated region
      $region21: #{supcon_loss.1} parent=15 // pred_check
        %p178 = pneg %p68
      $region22: #{supcon_loss.1} parent=15 // pred_check_branch
        %180 = sbr.rel (%p178) target = $region24
      $region23: #{supcon_loss.1} parent=15 // pred_region
        %s181 = smul.u32 16, %s18
        %p182 = scmp.lt.s32.totalorder %s181, 31
        %s183 = scalar_select %p182, %s181, 31
        %s184 = smul.addr %s183, 4
        %s185 = scalar_lea.vmem %s1, %s184
        %s186 = smul.u32 16, %s18
      $region24: #{supcon_loss.1} parent=15 // pred_fallthru
        _
      // Predicated region
      $region25: #{supcon_loss.1} parent=15 // pred_check
        %p187 = pneg %p94
      $region26: #{supcon_loss.1} parent=15 // pred_check_branch
        %189 = sbr.rel (%p187) target = $region28
      $region27: #{supcon_loss.1} parent=15 // pred_region
        %p190 = scmp.lt.s32.totalorder %s17, 2
        %s191 = scalar_select %p190, %s17, 2
        %s192 = smul.addr %s191, 8
        %s193 = scalar_lea.vmem %s2, %s192
      $region28: #{supcon_loss.1} parent=15 // pred_fallthru
        _
      // Predicated region
      $region29: #{supcon_loss.1} parent=15 // pred_check
        %p194 = pneg %p120
      $region30: #{supcon_loss.1} parent=15 // pred_check_branch
        %196 = sbr.rel (%p194) target = $region32
      $region31: #{supcon_loss.1} parent=15 // pred_region
        %p197 = scmp.lt.s32.totalorder %s18, 1
        %s198 = scalar_select %p197, %s18, 1
        %s199 = scalar_lea.vmem %s3, %s198
      $region32: #{supcon_loss.1} parent=15 // pred_fallthru
        _
    $region16: #{supcon_loss.1} parent=5 // pred_fallthru
      _
    %p200 = scmp.le.s32.totalorder 1, %s10
    %p201 = scmp.lt.s32.totalorder %s10, 7
    %p202 = pnand %p200, %p201
    %p203 = pneg %p202
    // Predicated region
    $region33: #{supcon_loss.1} parent=5 // pred_check
      _
    $region34: #{supcon_loss.1} parent=5 // pred_check_branch
      %205 = sbr.rel (%p202) target = $region36
    $region35: #{supcon_loss.1} parent=5 // pred_region
      %s206 = ssub.s32 %s10, 1
      %p207 = scmp.lt.s32.totalorder %s19, 2
      %s208 = scalar_select %p207, %s19, 2
      %s209 = smul.addr %s208, 8
      %s210 = scalar_lea.vmem %s0, %s209
      %p211 = pneg %p48
      %p212 = pneg %p45
      %s213 = smul.u32 16, %s20
      %p214 = scmp.lt.s32.totalorder %s213, 31
      %s215 = scalar_select %p214, %s213, 31
      %s216 = smul.addr %s215, 4
      %s217 = scalar_lea.vmem %s1, %s216
      %p218 = pneg %p74
      %p219 = pneg %p71
      %p220 = scmp.lt.s32.totalorder %s19, 2
      %s221 = scalar_select %p220, %s19, 2
      %s222 = smul.addr %s221, 8
      %s223 = scalar_lea.vmem %s2, %s222
      %p224 = pneg %p100
      %p225 = pneg %p97
      %p226 = scmp.lt.s32.totalorder %s20, 1
      %s227 = scalar_select %p226, %s20, 1
      %s228 = scalar_lea.vmem %s3, %s227
      %p229 = pneg %p126
      %p230 = pneg %p123
      %p231 = pneg %p152
      %p232 = pneg %p149
      %p233 = scmp.lt.s32.totalorder %s19, 2
      %s234 = scalar_select %p233, %s19, 2
      %s235 = smul.addr %s234, 8
      %s236 = scalar_lea.vmem %s4, %s235
      %p237 = scmp.lt.s32.totalorder %s19, 2
      %s238 = scalar_select %p237, %s19, 2
      %s239 = smul.addr %s238, 8
      %s240 = scalar_lea.vmem %s0, %s239
      %s241 = smul.u32 16, %s20
      %p242 = scmp.lt.s32.totalorder %s241, 31
      %s243 = scalar_select %p242, %s241, 31
      %s244 = smul.addr %s243, 4
      %s245 = scalar_lea.vmem %s1, %s244
      %s246 = smul.u32 16, %s20
      %p247 = scmp.lt.s32.totalorder %s19, 2
      %s248 = scalar_select %p247, %s19, 2
      %s249 = smul.addr %s248, 8
      %s250 = scalar_lea.vmem %s2, %s249
      %p251 = scmp.lt.s32.totalorder %s20, 1
      %s252 = scalar_select %p251, %s20, 1
      %s253 = scalar_lea.vmem %s3, %s252
      %p254 = scmp.lt.s32.totalorder %s19, 2
      %s255 = scalar_select %p254, %s19, 2
      %s256 = smul.addr %s255, 8
      %s257 = scalar_lea.vmem %s4, %s256
      %p258 = scmp.eq.s32.totalorder %s20, 0
      // Predicated region
      $region37: #{supcon_loss.1} parent=35 // pred_check
        %p259 = pneg %p258
      $region38: #{supcon_loss.1} parent=35 // pred_check_branch
        %261 = sbr.rel (%p259) target = $region40
      $region39: #{supcon_loss.1} parent=35 // pred_region
        %vm262 = vcmask 7168
        %263 = vst.msk [vmem:[#allocation2] sm:$0xff] %vm262, -inf
        %264 = vst.msk [vmem:[#allocation3] sm:$0xff] %vm262, 0.0
        %265 = vst.msk [vmem:[#allocation4] sm:$0xff] %vm262, 0.0
        %266 = vst.msk [vmem:[#allocation5] sm:$0xff] %vm262, 0.0
      $region40: #{supcon_loss.1} parent=35 // pred_fallthru
        _
      %v267 = vld [vmem:[%s240] sm:$0xff]
      %v268 = vpack.c.bf16 %v267, %v267
      %v269 = vld [vmem:[%s245] sm:$0xf]
      %v270 = vld [vmem:[%s245 + $0x4] sm:$0xf]
      %v271 = vld [vmem:[%s245 + $0x8] sm:$0xf]
      %v272 = vld [vmem:[%s245 + $0xc] sm:$0xf]
      %v273 = vld [vmem:[%s245 + $0x10] sm:$0xf]
      %v274 = vld [vmem:[%s245 + $0x14] sm:$0xf]
      %v275 = vld [vmem:[%s245 + $0x18] sm:$0xf]
      %v276 = vld [vmem:[%s245 + $0x1c] sm:$0xf]
      %v277 = vld [vmem:[%s245 + $0x20] sm:$0xf]
      %v278 = vld [vmem:[%s245 + $0x24] sm:$0xf]
      %v279 = vld [vmem:[%s245 + $0x28] sm:$0xf]
      %v280 = vld [vmem:[%s245 + $0x2c] sm:$0xf]
      %v281 = vld [vmem:[%s245 + $0x30] sm:$0xf]
      %v282 = vld [vmem:[%s245 + $0x34] sm:$0xf]
      %v283 = vld [vmem:[%s245 + $0x38] sm:$0xf]
      %v284 = vld [vmem:[%s245 + $0x3c] sm:$0xf]
      %v301 = vunpack.c.l.b16 %v269
      %v302 = vunpack.c.l.b16 %v270
      %v303 = vunpack.c.l.b16 %v271
      %v304 = vunpack.c.l.b16 %v272
      %v305 = vunpack.c.l.b16 %v273
      %v306 = vunpack.c.l.b16 %v274
      %v307 = vunpack.c.l.b16 %v275
      %v308 = vunpack.c.l.b16 %v276
      %v309 = vunpack.c.l.b16 %v277
      %v310 = vunpack.c.l.b16 %v278
      %v311 = vunpack.c.l.b16 %v279
      %v312 = vunpack.c.l.b16 %v280
      %v313 = vunpack.c.l.b16 %v281
      %v314 = vunpack.c.l.b16 %v282
      %v315 = vunpack.c.l.b16 %v283
      %v316 = vunpack.c.l.b16 %v284
      %v317 = vpack.c.b16 %v302, %v301
      %v318 = vpack.c.b16 %v304, %v303
      %v319 = vpack.c.b16 %v306, %v305
      %v320 = vpack.c.b16 %v308, %v307
      %v321 = vpack.c.b16 %v310, %v309
      %v322 = vpack.c.b16 %v312, %v311
      %v323 = vpack.c.b16 %v314, %v313
      %v324 = vpack.c.b16 %v316, %v315
      %vm325 = vcmask 523264
      %v327 = vsel %vm325, %v268, 0
      %v330 = vsel %vm325, %v317, 0
      %v333 = vsel %vm325, %v318, 0
      %v336 = vsel %vm325, %v319, 0
      %v339 = vsel %vm325, %v320, 0
      %v342 = vsel %vm325, %v321, 0
      %v345 = vsel %vm325, %v322, 0
      %v348 = vsel %vm325, %v323, 0
      %v351 = vsel %vm325, %v324, 0
      %353 = vmatpush.bf16.xpose.msra.mxu0 %v351
      %354 = vmatpush.bf16.xpose.msra.mxu0 %v348
      %355 = vmatpush.bf16.xpose.msra.mxu0 %v345
      %356 = vmatpush.bf16.xpose.msra.mxu0 %v342
      %357 = vmatpush.bf16.xpose.msra.mxu0 %v339
      %358 = vmatpush.bf16.xpose.msra.mxu0 %v336
      %359 = vmatpush.bf16.xpose.msra.mxu0 %v333
      %360 = vmatpush.bf16.xpose.msra.mxu0 %v330
      %361 = vmatmul.bf16.gmra.mxu0 %v327
      %v362 = vpop.f32.mrf.mxu0
      %v363 = vadd.f32 0.0, %v362
      %v364 = vpop.f32.mrf.mxu0
      %365 = vdwg.mxu0
      %v366 = vld [vmem:[%s250] sm:$0xff]
      %v367 = vld [vmem:[%s253] sm:$0x1]
      %368 = vset.pattern.permute.xlu0 0
      %369 = vperm.xlu0 %368, %v366
      %v370 = vpop.permute.xlu0 %369
      %v371 = vperm.slane %v367, 0
      %vm372 = vcmp.eq.s32.totalorder %v370, %v371
      %s373 = smul.u32 %s20, 128
      %v374 = vlaneseq
      %v375 = vand.u32 %v374, 127
      %v376 = vstv %s373
      %v377 = vadd.s32 %v376, %v375
      %vm378 = vcmp.lt.s32.totalorder %v377, 200
      %vm379 = vmand %vm372, %vm378
      %v380 = vsel %vm378, %v363, -inf
      %v381 = vld [vmem:[#allocation2] sm:$0xff]
      %382 = vmax.xlane.f32.xlu0 %v380
      %v383 = vpop.xlane.xlu0 %382
      %v384 = vmax.f32 %v381, %v383
      %v385 = vld [vmem:[#allocation3] sm:$0xff]
      %v386 = vsub.f32 %v381, %v384
      %v387 = vmul.f32 %v386, 1.442695
      %v388 = vpow.pop %v387
      %v389 = vmul.f32 %v385, %v388
      %391 = vset.pattern.permute.xlu0 0
      %392 = vperm.xlu0 %391, %v384
      %v393 = vpop.permute.xlu0 %392
      %v395 = vsub.f32 %v380, %v393
      %v396 = vmul.f32 %v395, 1.442695
      %v397 = vpow.pop %v396
      %398 = vadd.xlane.f32.xlu0 %v397
      %v399 = vpop.xlane.xlu0 %398
      %v400 = vadd.f32 %v389, %v399
      %vm401 = vcmask 7168
      %402 = vst.msk [vmem:[#allocation3] sm:$0xff] %vm401, %v400
      %403 = vst.msk [vmem:[#allocation2] sm:$0xff] %vm401, %v384
      %v404 = vld [vmem:[#allocation4] sm:$0xff]
      %v405 = vsel %vm379, %v380, 0.0
      %406 = vadd.xlane.f32.xlu0 %v405
      %v407 = vpop.xlane.xlu0 %406
      %v408 = vadd.f32 %v404, %v407
      %409 = vst.msk [vmem:[#allocation4] sm:$0xff] %vm401, %v408
      %v410 = vld [vmem:[#allocation5] sm:$0xff]
      %v411 = vsel %vm379, 1.0, 0.0
      %412 = vadd.xlane.f32.xlu0 %v411
      %v413 = vpop.xlane.xlu0 %412
      %v414 = vadd.f32 %v410, %v413
      %415 = vst.msk [vmem:[#allocation5] sm:$0xff] %vm401, %v414
      %p416 = scmp.eq.s32.totalorder %s20, 1
      // Predicated region
      $region41: #{supcon_loss.1} parent=35 // pred_check
        %p417 = pneg %p416
      $region42: #{supcon_loss.1} parent=35 // pred_check_branch
        %419 = sbr.rel (%p417) target = $region44
      $region43: #{supcon_loss.1} parent=35 // pred_region
        %v420 = vld [vmem:[#allocation2] sm:$0xff]
        %v421 = vld [vmem:[#allocation3] sm:$0xff]
        %v422 = vlog2.pop %v421
        %v423 = vmul.f32 %v422, 0.6931472
        %v424 = vadd.f32 %v420, %v423
        %v425 = vld [vmem:[#allocation4] sm:$0xff]
        %v426 = vld [vmem:[#allocation5] sm:$0xff]
        %v427 = vmul.f32 %v426, %v424
        %v428 = vsub.f32 %v425, %v427
        %v429 = vrcp.pop %v426
        %v430 = vmul.f32 %v426, %v429
        %v431 = vsub.f32 1.0, %v430
        %v432 = vmul.f32 %v429, %v431
        %v433 = vadd.f32 %v429, %v432
        %vm434 = vweird.f32 %v426
        %vm435 = vweird.f32 %v429
        %vm436 = vmor %vm434, %vm435
        %v437 = vsel %vm436, %v429, %v433
        %v438 = vand.u32 2147483647, %v426
        %vm439 = vcmp.eq.f32.partialorder %v438, 8.507059e+37
        %v440 = vand.u32 %v426, 2147483648
        %v441 = vor.u32 1.1754944e-38, %v440
        %v442 = vsel %vm439, %v441, %v437
        %v443 = vmul.f32 %v428, %v442
        %444 = vst.msk [vmem:[%s257] sm:$0xff] %vm401, %v443
      $region44: #{supcon_loss.1} parent=35 // pred_fallthru
        _
      %p445 = scmp.lt.s32.totalorder %s19, 2
      %s446 = scalar_select %p445, %s19, 2
      %s447 = smul.addr %s446, 8
      %s448 = scalar_lea.vmem %s4, %s447
      // Predicated region
      $region45: #{supcon_loss.1} parent=35 // pred_check
        %p449 = pneg %p149
      $region46: #{supcon_loss.1} parent=35 // pred_check_branch
        %451 = sbr.rel (%p449) target = $region48
      $region47: #{supcon_loss.1} parent=35 // pred_region
        _
      $region48: #{supcon_loss.1} parent=35 // pred_fallthru
        _
    $region36: #{supcon_loss.1} parent=5 // pred_fallthru
      _
    %p452 = scmp.le.s32.totalorder 2, %s10
    // Predicated region
    $region49: #{supcon_loss.1} parent=5 // pred_check
      %p453 = pneg %p452
    $region50: #{supcon_loss.1} parent=5 // pred_check_branch
      %455 = sbr.rel (%p453) target = $region52
    $region51: #{supcon_loss.1} parent=5 // pred_region
      %s456 = ssub.s32 %s10, 2
      // Predicated region
      $region53: #{supcon_loss.1} parent=51 // pred_check
        %p457 = pneg %p155
      $region54: #{supcon_loss.1} parent=51 // pred_check_branch
        %459 = sbr.rel (%p457) target = $region56
      $region55: #{supcon_loss.1} parent=51 // pred_region
        %p460 = scmp.lt.s32.totalorder %s21, 2
        %s461 = scalar_select %p460, %s21, 2
        %s462 = smul.addr %s461, 8
        %s463 = scalar_lea.vmem %s4, %s462
      $region56: #{supcon_loss.1} parent=51 // pred_fallthru
        _
    $region52: #{supcon_loss.1} parent=5 // pred_fallthru
      _
  $region6: #{supcon_loss.1} parent=0 // loop_footer
    %s14 = sadd.s32 1, %s10
  $region7: #{supcon_loss.1} parent=0 // loop_footer_branch
    %9 = sbr.rel target = $region3
  $region8: #{supcon_loss.1} parent=0 // loop_exit
    _

</llo_original>
